<compile_context>
chip_gen: v5e
topology: v5e:2x2
jax: 0.10.0
libtpu: 0.0.40
codegen_flags: <defaults>
</compile_context>

<pallas_src>
import functools

import jax
import jax.numpy as jnp
from jax.experimental import pallas as pl
from jax.experimental.pallas import tpu as pltpu

_LANE = 128
_SUB = 16  # sublane tile granule (16 keeps bf16 blocks legal as well as f32)


def _round_up(n, m):
    return ((n + m - 1) // m) * m


def _cdiv(a, b):
    return (a + b - 1) // b


def _pick_pack(in_size, hidden_size, out_size):
    """How many independent rows to pack onto the 128-lane axis."""
    if in_size >= _LANE or _LANE % in_size != 0:
        return 1
    pack = _LANE // in_size
    widest = max(in_size, hidden_size, out_size)
    while pack > 1 and pack * widest > 512:  # keep block-diag weights small
        pack //= 2
    return max(pack, 1)


def _choose_tile(packed_rows, max_tile_packed):
    """Packed-row tile: multiple of the sublane granule, big, and giving an
    even grid-step count when there is more than one step (v7x 2-TC balance)."""
    max_tile = max(_SUB, (max_tile_packed // _SUB) * _SUB)
    if packed_rows <= max_tile:
        return packed_rows  # single step; packed_rows is already a _SUB multiple
    steps = _cdiv(packed_rows, max_tile)
    if steps % 2:
        steps += 1
    return max(_SUB, _round_up(_cdiv(packed_rows, steps), _SUB))


def _block_diag(w, pack):
    """w: PyTorch layout (out, in).  Returns (pack*in, pack*out) block-diagonal
    expansion of w.T (one block per packed row)."""
    return jnp.kron(jnp.eye(pack, dtype=w.dtype), w.T)


def _mlp_kernel(x_ref, w0_ref, b0_ref, w1_ref, b1_ref, w2_ref, b2_ref, o_ref):
    # x tile: (tile_packed_rows, pack*in).  Weights are block-diagonal, so each
    # packed row holds `pack` independent rows flowing through their own block.
    cdt = w0_ref.dtype  # compute dtype of the weights (f32 or bf16)

    x = x_ref[...]
    h = jnp.dot(x, w0_ref[...], preferred_element_type=jnp.float32) + b0_ref[...]
    h = jnp.maximum(h, 0.0)
    h = jnp.dot(h.astype(cdt), w1_ref[...],
                preferred_element_type=jnp.float32) + b1_ref[...]
    h = jnp.maximum(h, 0.0)
    out = jnp.dot(h.astype(cdt), w2_ref[...],
                  preferred_element_type=jnp.float32) + b2_ref[...]
    o_ref[...] = out.astype(o_ref.dtype)


@functools.partial(jax.jit, static_argnames=("max_tile_rows", "use_bf16"))
def particle_predictor(x, params, max_tile_rows=65536, use_bf16=False):
    """x: (..., input_size). params: PyTorch-layout weights w{0,1,2}: (out, in),
    biases b{0,1,2}: (out,)."""
    w0, b0 = params["w0"], params["b0"]
    w1, b1 = params["w1"], params["b1"]
    w2, b2 = params["w2"], params["b2"]

    in_size = w0.shape[1]
    hid = w0.shape[0]
    out_size = w2.shape[0]

    lead_shape = x.shape[:-1]
    x2d = x.reshape(-1, in_size)
    n_rows = x2d.shape[0]

    # --- row packing: (N, in) -> (N/pack, pack*in); free contiguous reshape ---
    pack = _pick_pack(in_size, hid, out_size)
    granule = pack * _SUB  # pad rows only to this small granule, not the tile
    padded_rows = _round_up(max(n_rows, 1), granule)
    if padded_rows != n_rows:
        x2d = jnp.pad(x2d, ((0, padded_rows - n_rows), (0, 0)))
    packed_rows = padded_rows // pack
    x_packed = x2d.reshape(packed_rows, pack * in_size)

    d0 = pack * in_size
    d1 = pack * hid
    d2 = pack * out_size

    # --- block-diagonal weight / tiled bias expansion (tiny, one-time cost) ---
    w0bd = _block_diag(w0, pack)          # (d0, d1)
    w1bd = _block_diag(w1, pack)          # (d1, d1)
    w2bd = _block_diag(w2, pack)          # (d1, d2)
    b0t = jnp.tile(b0, pack).reshape(1, d1).astype(jnp.float32)
    b1t = jnp.tile(b1, pack).reshape(1, d1).astype(jnp.float32)
    b2t = jnp.tile(b2, pack).reshape(1, d2).astype(jnp.float32)

    if use_bf16:
        x_packed = x_packed.astype(jnp.bfloat16)
        w0bd, w1bd, w2bd = (w.astype(jnp.bfloat16) for w in (w0bd, w1bd, w2bd))

    # --- grid over packed rows; ragged last block handled by Pallas masking ---
    tile = _choose_tile(packed_rows, max_tile_rows // pack)
    grid = (_cdiv(packed_rows, tile),)

    resident = pl.BlockSpec(memory_space=pltpu.MemorySpace.VMEM)
    x_spec = pl.BlockSpec((tile, d0), lambda i: (i, 0))
    out_spec = pl.BlockSpec((tile, d2), lambda i: (i, 0))

    out_dtype = x.dtype  # output stays in the caller's dtype (f32 in the test)
    x_bytes = x_packed.dtype.itemsize
    o_bytes = jnp.dtype(out_dtype).itemsize
    w_bytes = w0bd.dtype.itemsize
    cost = pl.CostEstimate(
        flops=2 * packed_rows * (d0 * d1 + d1 * d1 + d1 * d2),
        transcendentals=0,
        bytes_accessed=(packed_rows * d0 * x_bytes
                        + packed_rows * d2 * o_bytes
                        + (d0 * d1 + d1 * d1 + d1 * d2) * w_bytes),
    )

    out_packed = pl.pallas_call(
        _mlp_kernel,
        out_shape=jax.ShapeDtypeStruct((packed_rows, d2), out_dtype),
        grid_spec=pltpu.PrefetchScalarGridSpec(
            num_scalar_prefetch=0,
            grid=grid,
            in_specs=[
                x_spec,    # x packed row tile (lane-dense)
                resident,  # w0 block-diag
                resident,  # b0 tiled
                resident,  # w1 block-diag
                resident,  # b1 tiled
                resident,  # w2 block-diag
                resident,  # b2 tiled
            ],
            out_specs=out_spec,
        ),
        compiler_params=pltpu.CompilerParams(
            dimension_semantics=("parallel",),
            vmem_limit_bytes=32 * 1024 * 1024,
        ),
        cost_estimate=cost,
    )(x_packed, w0bd, b0t, w1bd, b1t, w2bd, b2t)

    # (N/pack, pack*out) -> (padded_rows, out): free contiguous reshape.
    out2d = out_packed.reshape(padded_rows, out_size)
    if padded_rows != n_rows:
        out2d = out2d[:n_rows]
    return out2d.reshape(lead_shape + (out_size,))


def init_params(key, input_size, hidden_size, output_size):
    """nn.Linear-style U(-1/sqrt(fan_in), 1/sqrt(fan_in)) init.
    Weights in PyTorch layout: (out_features, in_features)."""
    ks = jax.random.split(key, 6)

    def lin(kw, kb, fan_in, fan_out):
        bound = 1.0 / jnp.sqrt(fan_in)
        w = jax.random.uniform(kw, (fan_out, fan_in), jnp.float32, -bound, bound)
        b = jax.random.uniform(kb, (fan_out,), jnp.float32, -bound, bound)
        return w, b

    w0, b0 = lin(ks[0], ks[1], input_size, hidden_size)
    w1, b1 = lin(ks[2], ks[3], hidden_size, hidden_size)
    w2, b2 = lin(ks[4], ks[5], hidden_size, output_size)
    return {"w0": w0, "b0": b0, "w1": w1, "b1": b1, "w2": w2, "b2": b2}


def _reference(x, p):
    hp = jax.lax.Precision.HIGHEST
    lead = x.shape[:-1]
    x2d = x.reshape(-1, x.shape[-1])
    h0 = jnp.maximum(jnp.dot(x2d, p["w0"].T, precision=hp) + p["b0"], 0.0)
    h1 = jnp.maximum(jnp.dot(h0, p["w1"].T, precision=hp) + p["b1"], 0.0)
    o = jnp.dot(h1, p["w2"].T, precision=hp) + p["b2"]
    return o.reshape(lead + (-1,))


if __name__ == "__main__":
    key = jax.random.PRNGKey(0)
    k_param, k_x = jax.random.split(key)

    input_size, hidden_size, output_size = 16, 32, 8
    batch, n_particles = 2, 8  # flattened rows = 16

    params = init_params(k_param, input_size, hidden_size, output_size)
    x = jax.random.normal(k_x, (batch, n_particles, input_size), jnp.float32)

    ref = _reference(x, params)

    # f32 path (default).  Tolerance covers any difference in f32-matmul
    # pass-count between Mosaic and the XLA reference.
    out = jax.block_until_ready(particle_predictor(x, params))
    assert out.shape == (batch, n_particles, output_size), out.shape
    assert jnp.allclose(out, ref, atol=5e-3, rtol=5e-3), "f32 mismatch vs reference"

    # bf16 streaming path (halves the dominant HBM stream on v6e/v7x);
    # accumulation stays f32, so only a modest tolerance relaxation is needed.
    out_bf16 = jax.block_until_ready(particle_predictor(x, params, use_bf16=True))
    assert out_bf16.shape == (batch, n_particles, output_size), out_bf16.shape
    assert jnp.allclose(out_bf16, ref, atol=5e-2, rtol=5e-2), "bf16 mismatch vs reference"

    print("KERNEL_OK")
</pallas_src>

<mosaic_0001>
module attributes {stable_mosaic.version = 11 : i64} {
  func.func @_mlp_kernel(%arg0: i32, %arg1: memref<16x128xf32, #tpu.memory_space<vmem>>, %arg2: memref<128x256xf32, #tpu.memory_space<vmem>>, %arg3: memref<1x256xf32, #tpu.memory_space<vmem>>, %arg4: memref<256x256xf32, #tpu.memory_space<vmem>>, %arg5: memref<1x256xf32, #tpu.memory_space<vmem>>, %arg6: memref<256x64xf32, #tpu.memory_space<vmem>>, %arg7: memref<1x64xf32, #tpu.memory_space<vmem>>, %arg8: memref<16x64xf32, #tpu.memory_space<vmem>>) attributes {dimension_semantics = [#tpu.dimension_semantics<parallel>], iteration_bounds = array<i64: 1>, scalar_prefetch = 0 : i64, scratch_operands = 0 : i64, tpu.core_type = #tpu.core_type<tc>, window_params = [{transform_indices = @transform_0, window_bounds = array<i64: 16, 128>}, {pipeline_mode = #tpu.pipeline_mode<synchronous>, transform_indices = @transform_1, window_bounds = array<i64: 128, 256>}, {pipeline_mode = #tpu.pipeline_mode<synchronous>, transform_indices = @transform_2, window_bounds = array<i64: 1, 256>}, {pipeline_mode = #tpu.pipeline_mode<synchronous>, transform_indices = @transform_3, window_bounds = array<i64: 256, 256>}, {pipeline_mode = #tpu.pipeline_mode<synchronous>, transform_indices = @transform_4, window_bounds = array<i64: 1, 256>}, {pipeline_mode = #tpu.pipeline_mode<synchronous>, transform_indices = @transform_5, window_bounds = array<i64: 256, 64>}, {pipeline_mode = #tpu.pipeline_mode<synchronous>, transform_indices = @transform_6, window_bounds = array<i64: 1, 64>}, {transform_indices = @transform_7, window_bounds = array<i64: 16, 64>}]} {
    %c0 = arith.constant 0 : index
    %c0_0 = arith.constant 0 : index
    %0 = vector.load %arg1[%c0, %c0_0] : memref<16x128xf32, #tpu.memory_space<vmem>>, vector<16x128xf32>
    %c0_1 = arith.constant 0 : index
    %c0_2 = arith.constant 0 : index
    %1 = vector.load %arg2[%c0_1, %c0_2] : memref<128x256xf32, #tpu.memory_space<vmem>>, vector<128x256xf32>
    %cst = arith.constant dense<0.000000e+00> : vector<16x256xf32>
    %2 = tpu.matmul %0, %1, %cst {dimension_numbers = #tpu.dot_dimension_numbers<[1], [0], [0], [1], [0, 0, 1, 1], [], []>} : vector<16x128xf32>, vector<128x256xf32>, vector<16x256xf32> -> vector<16x256xf32>
    %c0_3 = arith.constant 0 : index
    %c0_4 = arith.constant 0 : index
    %3 = vector.load %arg3[%c0_3, %c0_4] : memref<1x256xf32, #tpu.memory_space<vmem>>, vector<1x256xf32>
    %4 = vector.broadcast %3 : vector<1x256xf32> to vector<16x256xf32>
    %5 = arith.addf %2, %4 : vector<16x256xf32>
    %cst_5 = arith.constant 0.000000e+00 : f32
    %6 = vector.broadcast %cst_5 : f32 to vector<16x256xf32>
    %7 = arith.maximumf %5, %6 : vector<16x256xf32>
    %c0_6 = arith.constant 0 : index
    %c0_7 = arith.constant 0 : index
    %8 = vector.load %arg4[%c0_6, %c0_7] : memref<256x256xf32, #tpu.memory_space<vmem>>, vector<256x256xf32>
    %cst_8 = arith.constant dense<0.000000e+00> : vector<16x256xf32>
    %9 = tpu.matmul %7, %8, %cst_8 {dimension_numbers = #tpu.dot_dimension_numbers<[1], [0], [0], [1], [0, 0, 1, 1], [], []>} : vector<16x256xf32>, vector<256x256xf32>, vector<16x256xf32> -> vector<16x256xf32>
    %c0_9 = arith.constant 0 : index
    %c0_10 = arith.constant 0 : index
    %10 = vector.load %arg5[%c0_9, %c0_10] : memref<1x256xf32, #tpu.memory_space<vmem>>, vector<1x256xf32>
    %11 = vector.broadcast %10 : vector<1x256xf32> to vector<16x256xf32>
    %12 = arith.addf %9, %11 : vector<16x256xf32>
    %cst_11 = arith.constant 0.000000e+00 : f32
    %13 = vector.broadcast %cst_11 : f32 to vector<16x256xf32>
    %14 = arith.maximumf %12, %13 : vector<16x256xf32>
    %c0_12 = arith.constant 0 : index
    %c0_13 = arith.constant 0 : index
    %15 = vector.load %arg6[%c0_12, %c0_13] : memref<256x64xf32, #tpu.memory_space<vmem>>, vector<256x64xf32>
    %cst_14 = arith.constant dense<0.000000e+00> : vector<16x64xf32>
    %16 = tpu.matmul %14, %15, %cst_14 {dimension_numbers = #tpu.dot_dimension_numbers<[1], [0], [0], [1], [0, 0, 1, 1], [], []>} : vector<16x256xf32>, vector<256x64xf32>, vector<16x64xf32> -> vector<16x64xf32>
    %c0_15 = arith.constant 0 : index
    %c0_16 = arith.constant 0 : index
    %17 = vector.load %arg7[%c0_15, %c0_16] : memref<1x64xf32, #tpu.memory_space<vmem>>, vector<1x64xf32>
    %18 = vector.broadcast %17 : vector<1x64xf32> to vector<16x64xf32>
    %19 = arith.addf %16, %18 : vector<16x64xf32>
    %c0_17 = arith.constant 0 : index
    %c0_18 = arith.constant 0 : index
    %20 = vector.load %arg8[%c0_17, %c0_18] : memref<16x64xf32, #tpu.memory_space<vmem>>, vector<16x64xf32>
    tpu.vector_store %arg8[%c0_17, %c0_18], %19 {strides = array<i32>} : memref<16x64xf32, #tpu.memory_space<vmem>>, vector<16x64xf32>,
    return
  }
  func.func @transform_0(%arg0: i32) -> (i32, i32) {
    %c0_i32 = arith.constant 0 : i32
    %c0_i32_0 = arith.constant 0 : i32
    return %arg0, %c0_i32 : i32, i32
  }
  func.func @transform_1(%arg0: i32) -> (i32, i32) {
    %c0_i32 = arith.constant 0 : i32
    %c0_i32_0 = arith.constant 0 : i32
    %c0_i32_1 = arith.constant 0 : i32
    return %c0_i32, %c0_i32_0 : i32, i32
  }
  func.func @transform_2(%arg0: i32) -> (i32, i32) {
    %c0_i32 = arith.constant 0 : i32
    %c0_i32_0 = arith.constant 0 : i32
    %c0_i32_1 = arith.constant 0 : i32
    return %c0_i32, %c0_i32_0 : i32, i32
  }
  func.func @transform_3(%arg0: i32) -> (i32, i32) {
    %c0_i32 = arith.constant 0 : i32
    %c0_i32_0 = arith.constant 0 : i32
    %c0_i32_1 = arith.constant 0 : i32
    return %c0_i32, %c0_i32_0 : i32, i32
  }
  func.func @transform_4(%arg0: i32) -> (i32, i32) {
    %c0_i32 = arith.constant 0 : i32
    %c0_i32_0 = arith.constant 0 : i32
    %c0_i32_1 = arith.constant 0 : i32
    return %c0_i32, %c0_i32_0 : i32, i32
  }
  func.func @transform_5(%arg0: i32) -> (i32, i32) {
    %c0_i32 = arith.constant 0 : i32
    %c0_i32_0 = arith.constant 0 : i32
    %c0_i32_1 = arith.constant 0 : i32
    return %c0_i32, %c0_i32_0 : i32, i32
  }
  func.func @transform_6(%arg0: i32) -> (i32, i32) {
    %c0_i32 = arith.constant 0 : i32
    %c0_i32_0 = arith.constant 0 : i32
    %c0_i32_1 = arith.constant 0 : i32
    return %c0_i32, %c0_i32_0 : i32, i32
  }
  func.func @transform_7(%arg0: i32) -> (i32, i32) {
    %c0_i32 = arith.constant 0 : i32
    %c0_i32_0 = arith.constant 0 : i32
    return %arg0, %c0_i32 : i32, i32
  }
}

</mosaic_0001>

<llo_original>
// kernel: tile.18
$region0: #{tile.18}
  #allocation0 [shape = 's32[1]{0}', space=sflag, size = 0x4, scoped, tag = 'scoped memory for tile.18']
  %s0 = inlined_call_operand.vmem [shape: f32[32], index: 0, kind: input, shape index: {}]
  %s1 = inlined_call_operand.vmem [shape: f32[8,32], index: 1, kind: output, shape index: {}]
  // Predicated region
  $region2: #{tile.18} parent=0 // pred_check
    _
  $region3: #{tile.18} parent=0 // pred_check_branch
    %3 = sbr.rel (0) target = $region5
  $region4: #{tile.18} parent=0 // pred_region
    _
  $region5: #{tile.18} parent=0 // pred_fallthru
    _
  %v4 = vld [vmem:[%s0] ss:$0 sm:$0xff]
  %5 = vst [vmem:[%s1] sm:$0xff] %v4

// kernel: tile.19
$region0: #{tile.19}
  %s0 = inlined_call_operand.vmem [shape: f32[8,32], index: 0, kind: input, shape index: {}]
  %s1 = inlined_call_operand.vmem [shape: f32[1,256], index: 1, kind: output, shape index: {}]
  $region1: #{tile.19} parent=0
    #allocation0 [shape = 'u8[8192]{0}', space=vmem, size = 0x2000, scoped, tag = 'scoped mem for output reshape']
    %s2 = smov 3
    %v3 = vld [vmem:[%s0] ss:$4 sm:%s2]
    %vm4 = vcmask 261120
    %5 = vst.msk [vmem:[#allocation0] ss:$8 sm:$0x3] %vm4, %v3
    %s6 = scalar_lea.vmem %s0, 3
    %s7 = smov 3
    %v8 = vld [vmem:[%s6] ss:$4 sm:%s7]
    %9 = vrot.lane.b32.xlu0 %v8, 96
    %v10 = vpop.permute.xlu0 %9
    %vm11 = vcmask 1048320
    %12 = vst.msk [vmem:[#allocation0] ss:$8 sm:$0x3] %vm11, %v10
    %s13 = scalar_lea.vmem %s0, 2
    %s14 = smov 3
    %v15 = vld [vmem:[%s13] ss:$4 sm:%s14]
    %16 = vrot.lane.b32.xlu0 %v15, 64
    %v17 = vpop.permute.xlu0 %16
    %vm18 = vcmask 785920
    %19 = vst.msk [vmem:[#allocation0] ss:$8 sm:$0x3] %vm18, %v17
    %s20 = scalar_lea.vmem %s0, 1
    %s21 = smov 3
    %v22 = vld [vmem:[%s20] ss:$4 sm:%s21]
    %23 = vrot.lane.b32.xlu0 %v22, 32
    %v24 = vpop.permute.xlu0 %23
    %vm25 = vcmask 523520
    %26 = vst.msk [vmem:[#allocation0] ss:$8 sm:$0x3] %vm25, %v24
    %s28 = ssub.s32 2, 1
    %v29 = vld [vmem:[#allocation0] sm:%s28]
    %s31 = ssub.s32 2, 1
    %32 = vst [vmem:[%s1] sm:%s31] %v29
    %s33 = scalar_lea.vmem [#allocation0], 8
    %v34 = vld [vmem:[%s33] sm:%s28]
    %s36 = ssub.s32 2, 1
    %s37 = scalar_lea.vmem %s1, 1
    %38 = vst [vmem:[%s37] sm:%s36] %v34

// kernel: tile.28
$region0: #{tile.28}
  #allocation0 [shape = 's32[1]{0}', space=sflag, size = 0x4, scoped, tag = 'scoped memory for tile.28']
  %s0 = inlined_call_operand.vmem [shape: f32[8], index: 0, kind: input, shape index: {}]
  %s1 = inlined_call_operand.vmem [shape: f32[8,8], index: 1, kind: output, shape index: {}]
  // Predicated region
  $region2: #{tile.28} parent=0 // pred_check
    _
  $region3: #{tile.28} parent=0 // pred_check_branch
    %3 = sbr.rel (0) target = $region5
  $region4: #{tile.28} parent=0 // pred_region
    _
  $region5: #{tile.28} parent=0 // pred_fallthru
    _
  %v4 = vld [vmem:[%s0] ss:$0 sm:$0xff]
  %5 = vst [vmem:[%s1] sm:$0xff] %v4

// kernel: tile.29
$region0: #{tile.29}
  %s0 = inlined_call_operand.vmem [shape: f32[8,8], index: 0, kind: input, shape index: {}]
  %s1 = inlined_call_operand.vmem [shape: f32[1,64], index: 1, kind: output, shape index: {}]
  $region1: #{tile.29} parent=0
    #allocation0 [shape = 'u8[4096]{0}', space=vmem, size = 0x1000, scoped, tag = 'scoped mem for output reshape']
    %v2 = vld [vmem:[%s0] sm:$0x1]
    %vm3 = vcmask 64512
    %4 = vst.msk [vmem:[#allocation0] sm:$0x1] %vm3, %v2
    %s5 = scalar_lea.vmem %s0, 7
    %v6 = vld [vmem:[%s5] sm:$0x1]
    %7 = vrot.lane.b32.xlu0 %v6, 56
    %v8 = vpop.permute.xlu0 %7
    %vm9 = vcmask 523712
    %10 = vst.msk [vmem:[#allocation0] sm:$0x1] %vm9, %v8
    %s11 = scalar_lea.vmem %s0, 6
    %v12 = vld [vmem:[%s11] sm:$0x1]
    %13 = vrot.lane.b32.xlu0 %v12, 48
    %v14 = vpop.permute.xlu0 %13
    %vm15 = vcmask 458112
    %16 = vst.msk [vmem:[#allocation0] sm:$0x1] %vm15, %v14
    %s17 = scalar_lea.vmem %s0, 5
    %v18 = vld [vmem:[%s17] sm:$0x1]
    %19 = vrot.lane.b32.xlu0 %v18, 40
    %v20 = vpop.permute.xlu0 %19
    %vm21 = vcmask 392512
    %22 = vst.msk [vmem:[#allocation0] sm:$0x1] %vm21, %v20
    %s23 = scalar_lea.vmem %s0, 4
    %v24 = vld [vmem:[%s23] sm:$0x1]
    %25 = vrot.lane.b32.xlu0 %v24, 32
    %v26 = vpop.permute.xlu0 %25
    %vm27 = vcmask 326912
    %28 = vst.msk [vmem:[#allocation0] sm:$0x1] %vm27, %v26
    %s29 = scalar_lea.vmem %s0, 3
    %v30 = vld [vmem:[%s29] sm:$0x1]
    %31 = vrot.lane.b32.xlu0 %v30, 24
    %v32 = vpop.permute.xlu0 %31
    %vm33 = vcmask 261312
    %34 = vst.msk [vmem:[#allocation0] sm:$0x1] %vm33, %v32
    %s35 = scalar_lea.vmem %s0, 2
    %v36 = vld [vmem:[%s35] sm:$0x1]
    %37 = vrot.lane.b32.xlu0 %v36, 16
    %v38 = vpop.permute.xlu0 %37
    %vm39 = vcmask 195712
    %40 = vst.msk [vmem:[#allocation0] sm:$0x1] %vm39, %v38
    %s41 = scalar_lea.vmem %s0, 1
    %v42 = vld [vmem:[%s41] sm:$0x1]
    %43 = vrot.lane.b32.xlu0 %v42, 8
    %v44 = vpop.permute.xlu0 %43
    %vm45 = vcmask 130112
    %46 = vst.msk [vmem:[#allocation0] sm:$0x1] %vm45, %v44
    %s48 = ssub.s32 2, 1
    %v49 = vld [vmem:[#allocation0] sm:%s48]
    %s51 = ssub.s32 2, 1
    %52 = vst [vmem:[%s1] sm:%s51] %v49

// kernel: particle_predictor.1
$region0: #{particle_predictor.1}
  #allocation0 [shape = 'u32[]', space=smem, size = 0x4, offset = 0x4, fixed_abs, tag = 'smem constant byte address 0x4 - core index']
  #allocation1 [shape = 'u32[72,128]{1,0:T(1,128)}', space=vmem, size = 0x9000, scoped, tag = 'internal scratch']
  %s0 = inlined_call_operand.vmem [shape: f32[16,128], index: 0, kind: input, shape index: {}]
  %s1 = inlined_call_operand.vmem [shape: f32[128,256], index: 1, kind: input, shape index: {}]
  %s2 = inlined_call_operand.vmem [shape: f32[1,256], index: 2, kind: input, shape index: {}]
  %s3 = inlined_call_operand.vmem [shape: f32[256,256], index: 3, kind: input, shape index: {}]
  %s4 = inlined_call_operand.vmem [shape: f32[1,256], index: 4, kind: input, shape index: {}]
  %s5 = inlined_call_operand.vmem [shape: f32[256,64], index: 5, kind: input, shape index: {}]
  %s6 = inlined_call_operand.vmem [shape: f32[1,64], index: 6, kind: input, shape index: {}]
  %s7 = inlined_call_operand.vmem [shape: f32[16,64], index: 7, kind: output, shape index: {}]
  %s8 = sld [smem:[#allocation0]]
  $region38: #{particle_predictor.1} parent=0
    _
  %s10 = ssub.s32 1, %s8
  %s11 = scalar_select 0, %s10, %s8
  // Predicated region
  $region2: #{particle_predictor.1} parent=0 // pred_check
    _
  $region3: #{particle_predictor.1} parent=0 // pred_check_branch
    %13 = sbr.rel (0) target = $region5
  $region4: #{particle_predictor.1} parent=0 // pred_region
    _
  $region5: #{particle_predictor.1} parent=0 // pred_fallthru
    _
  // Predicated region
  $region6: #{particle_predictor.1} parent=0 // pred_check
    _
  $region7: #{particle_predictor.1} parent=0 // pred_check_branch
    %15 = sbr.rel (0) target = $region9
  $region8: #{particle_predictor.1} parent=0 // pred_region
    _
  $region9: #{particle_predictor.1} parent=0 // pred_fallthru
    _
  // Predicated region
  $region10: #{particle_predictor.1} parent=0 // pred_check
    _
  $region11: #{particle_predictor.1} parent=0 // pred_check_branch
    %17 = sbr.rel (0) target = $region13
  $region12: #{particle_predictor.1} parent=0 // pred_region
    _
  $region13: #{particle_predictor.1} parent=0 // pred_fallthru
    _
  // Predicated region
  $region14: #{particle_predictor.1} parent=0 // pred_check
    _
  $region15: #{particle_predictor.1} parent=0 // pred_check_branch
    %19 = sbr.rel (0) target = $region17
  $region16: #{particle_predictor.1} parent=0 // pred_region
    _
  $region17: #{particle_predictor.1} parent=0 // pred_fallthru
    _
  // Predicated region
  $region18: #{particle_predictor.1} parent=0 // pred_check
    _
  $region19: #{particle_predictor.1} parent=0 // pred_check_branch
    %21 = sbr.rel (0) target = $region21
  $region20: #{particle_predictor.1} parent=0 // pred_region
    _
  $region21: #{particle_predictor.1} parent=0 // pred_fallthru
    _
  // Predicated region
  $region22: #{particle_predictor.1} parent=0 // pred_check
    _
  $region23: #{particle_predictor.1} parent=0 // pred_check_branch
    %23 = sbr.rel (0) target = $region25
  $region24: #{particle_predictor.1} parent=0 // pred_region
    _
  $region25: #{particle_predictor.1} parent=0 // pred_fallthru
    _
  // Predicated region
  $region26: #{particle_predictor.1} parent=0 // pred_check
    _
  $region27: #{particle_predictor.1} parent=0 // pred_check_branch
    %25 = sbr.rel (0) target = $region29
  $region28: #{particle_predictor.1} parent=0 // pred_region
    _
  $region29: #{particle_predictor.1} parent=0 // pred_fallthru
    _
  %v26 = vld [vmem:[%s0] sm:$0xff]
  %v27 = vld [vmem:[%s0 + $0x8] sm:$0xff]
  %v28 = vld [vmem:[%s1] sm:$0xff]
  %v29 = vld [vmem:[%s1 + $0x8] sm:$0xff]
  %v30 = vld [vmem:[%s1 + $0x10] sm:$0xff]
  %v31 = vld [vmem:[%s1 + $0x18] sm:$0xff]
  %v32 = vld [vmem:[%s1 + $0x20] sm:$0xff]
  %v33 = vld [vmem:[%s1 + $0x28] sm:$0xff]
  %v34 = vld [vmem:[%s1 + $0x30] sm:$0xff]
  %v35 = vld [vmem:[%s1 + $0x38] sm:$0xff]
  %v36 = vld [vmem:[%s1 + $0x40] sm:$0xff]
  %v37 = vld [vmem:[%s1 + $0x48] sm:$0xff]
  %v38 = vld [vmem:[%s1 + $0x50] sm:$0xff]
  %v39 = vld [vmem:[%s1 + $0x58] sm:$0xff]
  %v40 = vld [vmem:[%s1 + $0x60] sm:$0xff]
  %v41 = vld [vmem:[%s1 + $0x68] sm:$0xff]
  %v42 = vld [vmem:[%s1 + $0x70] sm:$0xff]
  %v43 = vld [vmem:[%s1 + $0x78] sm:$0xff]
  %v44 = vld [vmem:[%s1 + $0x80] sm:$0xff]
  %v45 = vld [vmem:[%s1 + $0x88] sm:$0xff]
  %v46 = vld [vmem:[%s1 + $0x90] sm:$0xff]
  %v47 = vld [vmem:[%s1 + $0x98] sm:$0xff]
  %v48 = vld [vmem:[%s1 + $0xa0] sm:$0xff]
  %v49 = vld [vmem:[%s1 + $0xa8] sm:$0xff]
  %v50 = vld [vmem:[%s1 + $0xb0] sm:$0xff]
  %v51 = vld [vmem:[%s1 + $0xb8] sm:$0xff]
  %v52 = vld [vmem:[%s1 + $0xc0] sm:$0xff]
  %v53 = vld [vmem:[%s1 + $0xc8] sm:$0xff]
  %v54 = vld [vmem:[%s1 + $0xd0] sm:$0xff]
  %v55 = vld [vmem:[%s1 + $0xd8] sm:$0xff]
  %v56 = vld [vmem:[%s1 + $0xe0] sm:$0xff]
  %v57 = vld [vmem:[%s1 + $0xe8] sm:$0xff]
  %v58 = vld [vmem:[%s1 + $0xf0] sm:$0xff]
  %v59 = vld [vmem:[%s1 + $0xf8] sm:$0xff]
  %v60 = vld [vmem:[%s2] sm:$0x3]
  %v62 = vperm.slane %v60, 0
  %v63 = vperm.slane %v60, 1
  %66 = vmatpush.msra.mxu0 %v58
  %67 = vmatpush.msra.mxu0 %v56
  %68 = vmatpush.msra.mxu0 %v54
  %69 = vmatpush.msra.mxu0 %v52
  %70 = vmatpush.msra.mxu0 %v50
  %71 = vmatpush.msra.mxu0 %v48
  %72 = vmatpush.msra.mxu0 %v46
  %73 = vmatpush.msra.mxu0 %v44
  %74 = vmatpush.msra.mxu0 %v42
  %75 = vmatpush.msra.mxu0 %v40
  %76 = vmatpush.msra.mxu0 %v38
  %77 = vmatpush.msra.mxu0 %v36
  %78 = vmatpush.msra.mxu0 %v34
  %79 = vmatpush.msra.mxu0 %v32
  %80 = vmatpush.msra.mxu0 %v30
  %81 = vmatpush.msra.mxu0 %v28
  %82 = vmatmul.f32.gmra.mxu0 %v26
  %v83 = vpop.f32.mrf.mxu0
  %v84 = vadd.f32 %v62, %v83
  %85 = vmatmul.f32.gmra.mxu0 %v27
  %v86 = vpop.f32.mrf.mxu0
  %v87 = vadd.f32 %v62, %v86
  %88 = vdwg.mxu0
  %89 = vmatpush.msra.mxu0 %v59
  %90 = vmatpush.msra.mxu0 %v57
  %91 = vmatpush.msra.mxu0 %v55
  %92 = vmatpush.msra.mxu0 %v53
  %93 = vmatpush.msra.mxu0 %v51
  %94 = vmatpush.msra.mxu0 %v49
  %95 = vmatpush.msra.mxu0 %v47
  %96 = vmatpush.msra.mxu0 %v45
  %97 = vmatpush.msra.mxu0 %v43
  %98 = vmatpush.msra.mxu0 %v41
  %99 = vmatpush.msra.mxu0 %v39
  %100 = vmatpush.msra.mxu0 %v37
  %101 = vmatpush.msra.mxu0 %v35
  %102 = vmatpush.msra.mxu0 %v33
  %103 = vmatpush.msra.mxu0 %v31
  %104 = vmatpush.msra.mxu0 %v29
  %105 = vmatmul.f32.gmra.mxu0 %v26
  %v106 = vpop.f32.mrf.mxu0
  %v107 = vadd.f32 %v63, %v106
  %108 = vmatmul.f32.gmra.mxu0 %v27
  %v109 = vpop.f32.mrf.mxu0
  %v110 = vadd.f32 %v63, %v109
  %111 = vdwg.mxu0
  %v112 = vmax.f32 %v84, 0.0
  %v113 = vmax.f32 %v107, 0.0
  %v114 = vmax.f32 %v87, 0.0
  %v115 = vmax.f32 %v110, 0.0
  %v116 = vld [vmem:[%s3] sm:$0xff]
  %v117 = vld [vmem:[%s3 + $0x8] sm:$0xff]
  %v118 = vld [vmem:[%s3 + $0x10] sm:$0xff]
  %v119 = vld [vmem:[%s3 + $0x18] sm:$0xff]
  %v120 = vld [vmem:[%s3 + $0x20] sm:$0xff]
  %v121 = vld [vmem:[%s3 + $0x28] sm:$0xff]
  %v122 = vld [vmem:[%s3 + $0x30] sm:$0xff]
  %v123 = vld [vmem:[%s3 + $0x38] sm:$0xff]
  %v124 = vld [vmem:[%s3 + $0x40] sm:$0xff]
  %v125 = vld [vmem:[%s3 + $0x48] sm:$0xff]
  %v126 = vld [vmem:[%s3 + $0x50] sm:$0xff]
  %v127 = vld [vmem:[%s3 + $0x58] sm:$0xff]
  %v128 = vld [vmem:[%s3 + $0x60] sm:$0xff]
  %v129 = vld [vmem:[%s3 + $0x68] sm:$0xff]
  %v130 = vld [vmem:[%s3 + $0x70] sm:$0xff]
  %v131 = vld [vmem:[%s3 + $0x78] sm:$0xff]
  %v132 = vld [vmem:[%s3 + $0x80] sm:$0xff]
  %v133 = vld [vmem:[%s3 + $0x88] sm:$0xff]
  %v134 = vld [vmem:[%s3 + $0x90] sm:$0xff]
  %v135 = vld [vmem:[%s3 + $0x98] sm:$0xff]
  %v136 = vld [vmem:[%s3 + $0xa0] sm:$0xff]
  %v137 = vld [vmem:[%s3 + $0xa8] sm:$0xff]
  %v138 = vld [vmem:[%s3 + $0xb0] sm:$0xff]
  %v139 = vld [vmem:[%s3 + $0xb8] sm:$0xff]
  %v140 = vld [vmem:[%s3 + $0xc0] sm:$0xff]
  %v141 = vld [vmem:[%s3 + $0xc8] sm:$0xff]
  %v142 = vld [vmem:[%s3 + $0xd0] sm:$0xff]
  %v143 = vld [vmem:[%s3 + $0xd8] sm:$0xff]
  %v144 = vld [vmem:[%s3 + $0xe0] sm:$0xff]
  %v145 = vld [vmem:[%s3 + $0xe8] sm:$0xff]
  %v146 = vld [vmem:[%s3 + $0xf0] sm:$0xff]
  %v147 = vld [vmem:[%s3 + $0xf8] sm:$0xff]
  %v148 = vld [vmem:[%s3 + $0x100] sm:$0xff]
  %v149 = vld [vmem:[%s3 + $0x108] sm:$0xff]
  %v150 = vld [vmem:[%s3 + $0x110] sm:$0xff]
  %v151 = vld [vmem:[%s3 + $0x118] sm:$0xff]
  %v152 = vld [vmem:[%s3 + $0x120] sm:$0xff]
  %v153 = vld [vmem:[%s3 + $0x128] sm:$0xff]
  %v154 = vld [vmem:[%s3 + $0x130] sm:$0xff]
  %v155 = vld [vmem:[%s3 + $0x138] sm:$0xff]
  %v156 = vld [vmem:[%s3 + $0x140] sm:$0xff]
  %v157 = vld [vmem:[%s3 + $0x148] sm:$0xff]
  %v158 = vld [vmem:[%s3 + $0x150] sm:$0xff]
  %v159 = vld [vmem:[%s3 + $0x158] sm:$0xff]
  %v160 = vld [vmem:[%s3 + $0x160] sm:$0xff]
  %v161 = vld [vmem:[%s3 + $0x168] sm:$0xff]
  %v162 = vld [vmem:[%s3 + $0x170] sm:$0xff]
  %v163 = vld [vmem:[%s3 + $0x178] sm:$0xff]
  %v164 = vld [vmem:[%s3 + $0x180] sm:$0xff]
  %v165 = vld [vmem:[%s3 + $0x188] sm:$0xff]
  %v166 = vld [vmem:[%s3 + $0x190] sm:$0xff]
  %v167 = vld [vmem:[%s3 + $0x198] sm:$0xff]
  %v168 = vld [vmem:[%s3 + $0x1a0] sm:$0xff]
  %v169 = vld [vmem:[%s3 + $0x1a8] sm:$0xff]
  %v170 = vld [vmem:[%s3 + $0x1b0] sm:$0xff]
  %v171 = vld [vmem:[%s3 + $0x1b8] sm:$0xff]
  %v172 = vld [vmem:[%s3 + $0x1c0] sm:$0xff]
  %v173 = vld [vmem:[%s3 + $0x1c8] sm:$0xff]
  %v174 = vld [vmem:[%s3 + $0x1d0] sm:$0xff]
  %v175 = vld [vmem:[%s3 + $0x1d8] sm:$0xff]
  %v176 = vld [vmem:[%s3 + $0x1e0] sm:$0xff]
  %v177 = vld [vmem:[%s3 + $0x1e8] sm:$0xff]
  %v178 = vld [vmem:[%s3 + $0x1f0] sm:$0xff]
  %v179 = vld [vmem:[%s3 + $0x1f8] sm:$0xff]
  %v180 = vld [vmem:[%s4] sm:$0x3]
  %v182 = vperm.slane %v180, 0
  %v183 = vperm.slane %v180, 1
  %186 = vmatpush.msra.mxu0 %v146
  %187 = vmatpush.msra.mxu0 %v144
  %188 = vmatpush.msra.mxu0 %v142
  %189 = vmatpush.msra.mxu0 %v140
  %190 = vmatpush.msra.mxu0 %v138
  %191 = vmatpush.msra.mxu0 %v136
  %192 = vmatpush.msra.mxu0 %v134
  %193 = vmatpush.msra.mxu0 %v132
  %194 = vmatpush.msra.mxu0 %v130
  %195 = vmatpush.msra.mxu0 %v128
  %196 = vmatpush.msra.mxu0 %v126
  %197 = vmatpush.msra.mxu0 %v124
  %198 = vmatpush.msra.mxu0 %v122
  %199 = vmatpush.msra.mxu0 %v120
  %200 = vmatpush.msra.mxu0 %v118
  %201 = vmatpush.msra.mxu0 %v116
  %202 = vmatmul.f32.gmra.mxu0 %v112
  %v203 = vpop.f32.mrf.mxu0
  %v204 = vadd.f32 %v182, %v203
  %205 = vmatmul.f32.gmra.mxu0 %v114
  %v206 = vpop.f32.mrf.mxu0
  %v207 = vadd.f32 %v182, %v206
  %208 = vdwg.mxu0
  %209 = vmatpush.msra.mxu0 %v178
  %210 = vmatpush.msra.mxu0 %v176
  %211 = vmatpush.msra.mxu0 %v174
  %212 = vmatpush.msra.mxu0 %v172
  %213 = vmatpush.msra.mxu0 %v170
  %214 = vmatpush.msra.mxu0 %v168
  %215 = vmatpush.msra.mxu0 %v166
  %216 = vmatpush.msra.mxu0 %v164
  %217 = vmatpush.msra.mxu0 %v162
  %218 = vmatpush.msra.mxu0 %v160
  %219 = vmatpush.msra.mxu0 %v158
  %220 = vmatpush.msra.mxu0 %v156
  %221 = vmatpush.msra.mxu0 %v154
  %222 = vmatpush.msra.mxu0 %v152
  %223 = vmatpush.msra.mxu0 %v150
  %224 = vmatpush.msra.mxu0 %v148
  %225 = vmatmul.f32.gmra.mxu0 %v113
  %v226 = vpop.f32.mrf.mxu0
  %v227 = vadd.f32 %v204, %v226
  %228 = vmatmul.f32.gmra.mxu0 %v115
  %v229 = vpop.f32.mrf.mxu0
  %v230 = vadd.f32 %v207, %v229
  %231 = vdwg.mxu0
  %232 = vmatpush.msra.mxu0 %v147
  %233 = vmatpush.msra.mxu0 %v145
  %234 = vmatpush.msra.mxu0 %v143
  %235 = vmatpush.msra.mxu0 %v141
  %236 = vmatpush.msra.mxu0 %v139
  %237 = vmatpush.msra.mxu0 %v137
  %238 = vmatpush.msra.mxu0 %v135
  %239 = vmatpush.msra.mxu0 %v133
  %240 = vmatpush.msra.mxu0 %v131
  %241 = vmatpush.msra.mxu0 %v129
  %242 = vmatpush.msra.mxu0 %v127
  %243 = vmatpush.msra.mxu0 %v125
  %244 = vmatpush.msra.mxu0 %v123
  %245 = vmatpush.msra.mxu0 %v121
  %246 = vmatpush.msra.mxu0 %v119
  %247 = vmatpush.msra.mxu0 %v117
  %248 = vmatmul.f32.gmra.mxu0 %v112
  %v249 = vpop.f32.mrf.mxu0
  %v250 = vadd.f32 %v183, %v249
  %251 = vmatmul.f32.gmra.mxu0 %v114
  %v252 = vpop.f32.mrf.mxu0
  %v253 = vadd.f32 %v183, %v252
  %254 = vdwg.mxu0
  %255 = vmatpush.msra.mxu0 %v179
  %256 = vmatpush.msra.mxu0 %v177
  %257 = vmatpush.msra.mxu0 %v175
  %258 = vmatpush.msra.mxu0 %v173
  %259 = vmatpush.msra.mxu0 %v171
  %260 = vmatpush.msra.mxu0 %v169
  %261 = vmatpush.msra.mxu0 %v167
  %262 = vmatpush.msra.mxu0 %v165
  %263 = vmatpush.msra.mxu0 %v163
  %264 = vmatpush.msra.mxu0 %v161
  %265 = vmatpush.msra.mxu0 %v159
  %266 = vmatpush.msra.mxu0 %v157
  %267 = vmatpush.msra.mxu0 %v155
  %268 = vmatpush.msra.mxu0 %v153
  %269 = vmatpush.msra.mxu0 %v151
  %270 = vmatpush.msra.mxu0 %v149
  %271 = vmatmul.f32.gmra.mxu0 %v113
  %v272 = vpop.f32.mrf.mxu0
  %v273 = vadd.f32 %v250, %v272
  %274 = vmatmul.f32.gmra.mxu0 %v115
  %v275 = vpop.f32.mrf.mxu0
  %v276 = vadd.f32 %v253, %v275
  %277 = vdwg.mxu0
  %v278 = vmax.f32 %v227, 0.0
  %v279 = vmax.f32 %v273, 0.0
  %v280 = vmax.f32 %v230, 0.0
  %v281 = vmax.f32 %v276, 0.0
  %v282 = vld [vmem:[%s5] sm:$0xff]
  %v283 = vld [vmem:[%s5 + $0x8] sm:$0xff]
  %v284 = vld [vmem:[%s5 + $0x10] sm:$0xff]
  %v285 = vld [vmem:[%s5 + $0x18] sm:$0xff]
  %v286 = vld [vmem:[%s5 + $0x20] sm:$0xff]
  %v287 = vld [vmem:[%s5 + $0x28] sm:$0xff]
  %v288 = vld [vmem:[%s5 + $0x30] sm:$0xff]
  %v289 = vld [vmem:[%s5 + $0x38] sm:$0xff]
  %v290 = vld [vmem:[%s5 + $0x40] sm:$0xff]
  %v291 = vld [vmem:[%s5 + $0x48] sm:$0xff]
  %v292 = vld [vmem:[%s5 + $0x50] sm:$0xff]
  %v293 = vld [vmem:[%s5 + $0x58] sm:$0xff]
  %v294 = vld [vmem:[%s5 + $0x60] sm:$0xff]
  %v295 = vld [vmem:[%s5 + $0x68] sm:$0xff]
  %v296 = vld [vmem:[%s5 + $0x70] sm:$0xff]
  %v297 = vld [vmem:[%s5 + $0x78] sm:$0xff]
  %v298 = vld [vmem:[%s5 + $0x80] sm:$0xff]
  %v299 = vld [vmem:[%s5 + $0x88] sm:$0xff]
  %v300 = vld [vmem:[%s5 + $0x90] sm:$0xff]
  %v301 = vld [vmem:[%s5 + $0x98] sm:$0xff]
  %v302 = vld [vmem:[%s5 + $0xa0] sm:$0xff]
  %v303 = vld [vmem:[%s5 + $0xa8] sm:$0xff]
  %v304 = vld [vmem:[%s5 + $0xb0] sm:$0xff]
  %v305 = vld [vmem:[%s5 + $0xb8] sm:$0xff]
  %v306 = vld [vmem:[%s5 + $0xc0] sm:$0xff]
  %v307 = vld [vmem:[%s5 + $0xc8] sm:$0xff]
  %v308 = vld [vmem:[%s5 + $0xd0] sm:$0xff]
  %v309 = vld [vmem:[%s5 + $0xd8] sm:$0xff]
  %v310 = vld [vmem:[%s5 + $0xe0] sm:$0xff]
  %v311 = vld [vmem:[%s5 + $0xe8] sm:$0xff]
  %v312 = vld [vmem:[%s5 + $0xf0] sm:$0xff]
  %v313 = vld [vmem:[%s5 + $0xf8] sm:$0xff]
  %v314 = vld [vmem:[%s6] sm:$0x1]
  %v316 = vperm.slane %v314, 0
  %318 = vmatpush.msra.mxu0 %v297
  %319 = vmatpush.msra.mxu0 %v296
  %320 = vmatpush.msra.mxu0 %v295
  %321 = vmatpush.msra.mxu0 %v294
  %322 = vmatpush.msra.mxu0 %v293
  %323 = vmatpush.msra.mxu0 %v292
  %324 = vmatpush.msra.mxu0 %v291
  %325 = vmatpush.msra.mxu0 %v290
  %326 = vmatpush.msra.mxu0 %v289
  %327 = vmatpush.msra.mxu0 %v288
  %328 = vmatpush.msra.mxu0 %v287
  %329 = vmatpush.msra.mxu0 %v286
  %330 = vmatpush.msra.mxu0 %v285
  %331 = vmatpush.msra.mxu0 %v284
  %332 = vmatpush.msra.mxu0 %v283
  %333 = vmatpush.msra.mxu0 %v282
  %334 = vmatmul.f32.gmra.mxu0 %v278
  %v335 = vpop.f32.mrf.mxu0
  %v336 = vadd.f32 %v316, %v335
  %337 = vmatmul.f32.gmra.mxu0 %v280
  %v338 = vpop.f32.mrf.mxu0
  %v339 = vadd.f32 %v316, %v338
  %340 = vdwg.mxu0
  %341 = vmatpush.msra.mxu0 %v313
  %342 = vmatpush.msra.mxu0 %v312
  %343 = vmatpush.msra.mxu0 %v311
  %344 = vmatpush.msra.mxu0 %v310
  %345 = vmatpush.msra.mxu0 %v309
  %346 = vmatpush.msra.mxu0 %v308
  %347 = vmatpush.msra.mxu0 %v307
  %348 = vmatpush.msra.mxu0 %v306
  %349 = vmatpush.msra.mxu0 %v305
  %350 = vmatpush.msra.mxu0 %v304
  %351 = vmatpush.msra.mxu0 %v303
  %352 = vmatpush.msra.mxu0 %v302
  %353 = vmatpush.msra.mxu0 %v301
  %354 = vmatpush.msra.mxu0 %v300
  %355 = vmatpush.msra.mxu0 %v299
  %356 = vmatpush.msra.mxu0 %v298
  %357 = vmatmul.f32.gmra.mxu0 %v279
  %v358 = vpop.f32.mrf.mxu0
  %v359 = vadd.f32 %v336, %v358
  %360 = vmatmul.f32.gmra.mxu0 %v281
  %v361 = vpop.f32.mrf.mxu0
  %v362 = vadd.f32 %v339, %v361
  %363 = vdwg.mxu0
  %vm364 = vcmask 523264
  %365 = vst.msk [vmem:[%s7] sm:$0xff] %vm364, %v359
  %366 = vst.msk [vmem:[%s7 + $0x8] sm:$0xff] %vm364, %v362
  // Predicated region
  $region30: #{particle_predictor.1} parent=0 // pred_check
    _
  $region31: #{particle_predictor.1} parent=0 // pred_check_branch
    %368 = sbr.rel (0) target = $region33
  $region32: #{particle_predictor.1} parent=0 // pred_region
    _
  $region33: #{particle_predictor.1} parent=0 // pred_fallthru
    _
  // Predicated region
  $region34: #{particle_predictor.1} parent=0 // pred_check
    _
  $region35: #{particle_predictor.1} parent=0 // pred_check_branch
    %370 = sbr.rel (0) target = $region37
  $region36: #{particle_predictor.1} parent=0 // pred_region
    _
  $region37: #{particle_predictor.1} parent=0 // pred_fallthru
    _

</llo_original>
